<compile_context>
chip_gen: v7x
topology: tpu7x:2x2x1
jax: 0.10.0
libtpu: 0.0.40
codegen_flags: <defaults>
</compile_context>

<pallas_src>
import functools

import jax
import jax.numpy as jnp
from jax.experimental import pallas as pl
from jax.experimental.pallas import tpu as pltpu


def _round_up(x, m):
    return (x + m - 1) // m * m


def _vmem_capacity_bytes():
    try:
        return int(pltpu.get_tpu_info().vmem_capacity_bytes)
    except Exception:  # noqa: BLE001
        return 64 * 1024 * 1024  # conservative: v7x per-TC VMEM


def _compiler_params(semantics, vmem_bytes):
    cap = _vmem_capacity_bytes()
    limit = max(1 << 20, min(int(vmem_bytes), int(cap * 0.9)))
    return pltpu.CompilerParams(dimension_semantics=semantics,
                                vmem_limit_bytes=limit)


# ---------------------------------------------------------------------------
# Feature probe: single buffering (pl.Buffered(1)) for grid-invariant inputs.
# ---------------------------------------------------------------------------
_SINGLE_BUF_OK = None


def _probe_copy_kernel(x_ref, o_ref):
    o_ref[...] = x_ref[...]


def _single_buffering_supported():
    """Probe pipeline_mode=pl.Buffered(1) once (eagerly); fall back if rejected."""
    global _SINGLE_BUF_OK
    if _SINGLE_BUF_OK is None:
        try:
            x = jnp.zeros((8, 128), jnp.float32)
            out = pl.pallas_call(
                _probe_copy_kernel,
                grid=(1,),
                in_specs=[pl.BlockSpec((8, 128), lambda i: (0, 0),
                                       pipeline_mode=pl.Buffered(1))],
                out_specs=pl.BlockSpec((8, 128), lambda i: (0, 0)),
                out_shape=jax.ShapeDtypeStruct((8, 128), jnp.float32),
            )(x)
            jax.block_until_ready(out)
            _SINGLE_BUF_OK = True
        except Exception:  # noqa: BLE001 - any rejection -> double buffering
            _SINGLE_BUF_OK = False
    return _SINGLE_BUF_OK


# ---------------------------------------------------------------------------
# Fused path: whole GraphConv stack in one grid=(1,) pallas_call.
# ---------------------------------------------------------------------------
def _gcn_fused_kernel(a_ref, h_ref, *rest, n_layers, hw_first):
    # rest = (w_0..w_{L-1}, b_0..b_{L-1}, o_ref)
    w_refs = rest[:n_layers]
    b_refs = rest[n_layers:2 * n_layers]
    o_ref = rest[2 * n_layers]

    a = a_ref[...]
    h = h_ref[...]
    for i in range(n_layers):                      # static unroll (L is small)
        w = w_refs[i][...]
        b = b_refs[i][...]
        if hw_first[i]:
            # transform first: N^2 term scales with f_out (< f_in here)
            t = jnp.dot(h, w, preferred_element_type=jnp.float32)
            z = jnp.dot(a, t.astype(jnp.bfloat16),
                        preferred_element_type=jnp.float32) + b
        else:
            # aggregate first: N^2 term scales with f_in (<= f_out here)
            t = jnp.dot(a, h, preferred_element_type=jnp.float32)
            z = jnp.dot(t.astype(jnp.bfloat16), w,
                        preferred_element_type=jnp.float32) + b
        if i != n_layers - 1:
            h = jnp.maximum(z, 0.0).astype(jnp.bfloat16)   # f32 ReLU epilogue
        else:
            o_ref[...] = z                                  # lane-dense f32 store


def _gcn_fused_call(a_p, h_p, ws, bs, *, single):
    n_pad = a_p.shape[0]
    n_layers = len(ws)
    hw_first = tuple(w.shape[1] < w.shape[0] for w in ws)
    fo_last = ws[-1].shape[1]

    flops = 0
    for w, first in zip(ws, hw_first):
        fi, fo = w.shape
        if first:
            flops += 2 * n_pad * fi * fo + 2 * n_pad * n_pad * fo
        else:
            flops += 2 * n_pad * n_pad * fi + 2 * n_pad * fi * fo
    in_bytes = (a_p.size * 2 + h_p.size * 2
                + sum(w.size * 2 for w in ws) + sum(b.size * 4 for b in bs))
    out_bytes = n_pad * fo_last * 4
    max_f = max([h_p.shape[1]] + [w.shape[1] for w in ws])
    vmem_bytes = (in_bytes + 2 * out_bytes          # output double-buffered
                  + 2 * n_pad * max_f * 4           # live f32 intermediates
                  + (2 << 20))                      # headroom

    in_specs = (
        [pl.BlockSpec(a_p.shape, lambda i: (0, 0), pipeline_mode=single),
         pl.BlockSpec(h_p.shape, lambda i: (0, 0), pipeline_mode=single)]
        + [pl.BlockSpec(w.shape, lambda i: (0, 0), pipeline_mode=single)
           for w in ws]
        + [pl.BlockSpec(b.shape, lambda i: (0, 0), pipeline_mode=single)
           for b in bs]
    )
    kernel = functools.partial(_gcn_fused_kernel, n_layers=n_layers,
                               hw_first=hw_first)
    return pl.pallas_call(
        kernel,
        grid=(1,),
        in_specs=in_specs,
        out_specs=pl.BlockSpec((n_pad, fo_last), lambda i: (0, 0)),
        out_shape=jax.ShapeDtypeStruct((n_pad, fo_last), jnp.float32),
        compiler_params=_compiler_params(("arbitrary",), vmem_bytes),
        cost_estimate=pl.CostEstimate(flops=flops, transcendentals=0,
                                      bytes_accessed=in_bytes + out_bytes),
    )(a_p, h_p, *ws, *bs)


# ---------------------------------------------------------------------------
# Tiled fallback (large graphs): per-layer transform + aggregate kernels.
# ---------------------------------------------------------------------------
_TM = 256   # output-row tile
_TK = 512   # contraction tile (bf16): 256-multiples saturate the v6e/v7x MXU


def _pick_tile(n_pad, target):
    t = min(target, n_pad)
    while n_pad % t != 0:
        t //= 2
    return t


def _xform_kernel(h_ref, w_ref, *rest, relu, add_bias):
    if add_bias:
        b_ref, o_ref = rest
    else:
        (o_ref,) = rest
    z = jnp.dot(h_ref[...], w_ref[...], preferred_element_type=jnp.float32)
    if add_bias:
        z = z + b_ref[...]
    if relu:
        z = jnp.maximum(z, 0.0)
    o_ref[...] = z.astype(o_ref.dtype)


def _xform_call(h_p, w_p, b_p, *, relu, add_bias, out_dtype, tm, single):
    n_pad, fi_p = h_p.shape
    fo_p = w_p.shape[1]
    out_size = jnp.dtype(out_dtype).itemsize
    in_specs = [pl.BlockSpec((tm, fi_p), lambda i: (i, 0)),
                pl.BlockSpec((fi_p, fo_p), lambda i: (0, 0),
                             pipeline_mode=single)]
    args = [h_p, w_p]
    if add_bias:
        in_specs.append(pl.BlockSpec((1, fo_p), lambda i: (0, 0),
                                     pipeline_mode=single))
        args.append(b_p)
    vmem_bytes = (2 * tm * fi_p * 2 + fi_p * fo_p * 2 + fo_p * 4
                  + 2 * tm * fo_p * out_size + tm * fo_p * 4 + (2 << 20))
    kernel = functools.partial(_xform_kernel, relu=relu, add_bias=add_bias)
    return pl.pallas_call(
        kernel,
        grid=(n_pad // tm,),
        in_specs=in_specs,
        out_specs=pl.BlockSpec((tm, fo_p), lambda i: (i, 0)),
        out_shape=jax.ShapeDtypeStruct((n_pad, fo_p), out_dtype),
        compiler_params=_compiler_params(("parallel",), vmem_bytes),
        cost_estimate=pl.CostEstimate(
            flops=2 * n_pad * fi_p * fo_p, transcendentals=0,
            bytes_accessed=n_pad * fi_p * 2 + fi_p * fo_p * 2
            + n_pad * fo_p * out_size),
    )(*args)


def _agg_kernel(a_ref, x_ref, *rest, relu, add_bias):
    if add_bias:
        b_ref, o_ref, acc_ref = rest
    else:
        o_ref, acc_ref = rest
    k = pl.program_id(1)

    @pl.when(k == 0)
    def _():
        acc_ref[...] = jnp.zeros_like(acc_ref)

    acc_ref[...] += jnp.dot(a_ref[...], x_ref[...],
                            preferred_element_type=jnp.float32)

    @pl.when(k == pl.num_programs(1) - 1)
    def _():
        z = acc_ref[...]
        if add_bias:
            z = z + b_ref[...]
        if relu:
            z = jnp.maximum(z, 0.0)
        o_ref[...] = z.astype(o_ref.dtype)


def _agg_call(a_p, x_p, b_p, *, relu, add_bias, out_dtype, tm, tk, single):
    n_pad = a_p.shape[0]
    f_p = x_p.shape[1]
    out_size = jnp.dtype(out_dtype).itemsize
    in_specs = [pl.BlockSpec((tm, tk), lambda i, k: (i, k)),
                pl.BlockSpec((tk, f_p), lambda i, k: (k, 0))]
    args = [a_p, x_p]
    if add_bias:
        in_specs.append(pl.BlockSpec((1, f_p), lambda i, k: (0, 0),
                                     pipeline_mode=single))
        args.append(b_p)
    vmem_bytes = (2 * tm * tk * 2 + 2 * tk * f_p * 2 + f_p * 4
                  + 2 * tm * f_p * out_size + tm * f_p * 4 + (2 << 20))
    kernel = functools.partial(_agg_kernel, relu=relu, add_bias=add_bias)
    return pl.pallas_call(
        kernel,
        grid=(n_pad // tm, n_pad // tk),
        in_specs=in_specs,
        out_specs=pl.BlockSpec((tm, f_p), lambda i, k: (i, 0)),
        out_shape=jax.ShapeDtypeStruct((n_pad, f_p), out_dtype),
        scratch_shapes=[pltpu.VMEM((tm, f_p), jnp.float32)],
        compiler_params=_compiler_params(("parallel", "arbitrary"), vmem_bytes),
        cost_estimate=pl.CostEstimate(
            flops=2 * n_pad * n_pad * f_p, transcendentals=0,
            bytes_accessed=n_pad * n_pad * 2 + n_pad * f_p * 2
            + n_pad * f_p * out_size),
    )(*args)


def _gcn_tiled_call(a_p, h_p, ws, bs, *, single):
    n_pad = a_p.shape[0]
    tm = _pick_tile(n_pad, _TM)
    tk = _pick_tile(n_pad, _TK)
    n_layers = len(ws)
    h = h_p
    for i in range(n_layers):
        w, b = ws[i], bs[i]
        last = i == n_layers - 1
        relu = not last
        out_dtype = jnp.float32 if last else jnp.bfloat16
        if w.shape[1] < w.shape[0]:          # transform first (f_out < f_in)
            t = _xform_call(h, w, b, relu=False, add_bias=False,
                            out_dtype=jnp.bfloat16, tm=tm, single=single)
            h = _agg_call(a_p, t, b, relu=relu, add_bias=True,
                          out_dtype=out_dtype, tm=tm, tk=tk, single=single)
        else:                                # aggregate first (f_out >= f_in)
            t = _agg_call(a_p, h, b, relu=False, add_bias=False,
                          out_dtype=jnp.bfloat16, tm=tm, tk=tk, single=single)
            h = _xform_call(t, w, b, relu=relu, add_bias=True,
                            out_dtype=out_dtype, tm=tm, single=single)
    return h


# ---------------------------------------------------------------------------
# Jitted forward + one-time setup (padding / casts hoisted out of per-call path).
# ---------------------------------------------------------------------------
@functools.partial(jax.jit,
                   static_argnames=("n_classes", "use_fused", "single_buf"))
def _gcn_apply(a_p, ws, bs, features, *, n_classes, use_fused, single_buf):
    n, f_in = features.shape
    n_pad = a_p.shape[0]
    fi0_p = ws[0].shape[0]
    single = pl.Buffered(1) if single_buf else None
    h_p = jnp.zeros((n_pad, fi0_p), jnp.bfloat16).at[:n, :f_in].set(
        features.astype(jnp.bfloat16))
    if use_fused:
        out_p = _gcn_fused_call(a_p, h_p, ws, bs, single=single)
    else:
        out_p = _gcn_tiled_call(a_p, h_p, ws, bs, single=single)
    return out_p[:n, :n_classes]


def make_gcn_forward(a_hat, params, *, force_tiled=False):
    """Pad/cast the graph + weights once; return a jitted `forward(features)`."""
    # TODO(synk): dropout is omitted - nn.Dropout is identity in eval mode.
    n = a_hat.shape[0]
    n_pad = _round_up(n, 128)
    n_classes = params[-1][0].shape[1]

    a_p = jnp.zeros((n_pad, n_pad), jnp.bfloat16).at[:n, :n].set(
        a_hat.astype(jnp.bfloat16))
    ws, bs = [], []
    for w, b in params:
        fi_p = _round_up(w.shape[0], 128)
        fo_p = _round_up(w.shape[1], 128)
        ws.append(jnp.zeros((fi_p, fo_p), jnp.bfloat16)
                  .at[:w.shape[0], :w.shape[1]].set(w.astype(jnp.bfloat16)))
        bs.append(jnp.zeros((1, fo_p), jnp.float32)
                  .at[0, :b.shape[0]].set(b.astype(jnp.float32)))
    ws, bs = tuple(ws), tuple(bs)

    # Fused (A_hat resident in VMEM) vs. per-layer tiled fallback, decided from
    # the actual padded buffer sizes against this chip's VMEM capacity.
    fi0_p = ws[0].shape[0]
    fused_bytes = (a_p.size * 2 + n_pad * fi0_p * 2
                   + sum(w.size * 2 for w in ws) + sum(b.size * 4 for b in bs)
                   + 2 * n_pad * ws[-1].shape[1] * 4
                   + 2 * n_pad * max(w.shape[1] for w in ws) * 4)
    use_fused = (not force_tiled) and (
        fused_bytes <= int(_vmem_capacity_bytes() * 0.55))
    single_buf = _single_buffering_supported()     # probed eagerly, once

    def forward(features):
        return _gcn_apply(a_p, ws, bs, features, n_classes=n_classes,
                          use_fused=use_fused, single_buf=single_buf)

    return forward


# ---------------------------------------------------------------------------
# Parameter / graph setup + pure-JAX reference.
# ---------------------------------------------------------------------------
def init_gcn_params(key, in_feats, n_hidden, n_classes, n_layers):
    """Deterministic Glorot-uniform weights, zero biases."""
    dims = [in_feats] + [n_hidden] * n_layers + [n_classes]
    params = []
    for i in range(len(dims) - 1):
        key, sub = jax.random.split(key)
        fan_in, fan_out = dims[i], dims[i + 1]
        limit = jnp.sqrt(6.0 / (fan_in + fan_out))
        w = jax.random.uniform(sub, (fan_in, fan_out), jnp.float32,
                               -limit, limit)
        b = jnp.zeros((fan_out,), jnp.float32)
        params.append((w, b))
    return params


def build_normalized_adjacency(key, n_nodes):
    """Random symmetric graph + self loops, symmetric-normalized (norm='both')."""
    a = jax.random.bernoulli(key, p=0.1, shape=(n_nodes, n_nodes)).astype(
        jnp.float32)
    a = jnp.maximum(a, a.T)
    a = jnp.maximum(a, jnp.eye(n_nodes, dtype=jnp.float32))
    deg = jnp.maximum(a.sum(axis=1), 1.0)
    norm = deg ** -0.5
    return norm[:, None] * a * norm[None, :]


def gcn_forward_ref(a_hat, features, params):
    """Pure-JAX f32 reference for correctness checking."""
    h = features
    n_layers = len(params)
    for i, (w, b) in enumerate(params):
        h = a_hat @ h @ w + b[None, :]
        if i != n_layers - 1:
            h = jnp.maximum(h, 0.0)
    return h


if __name__ == "__main__":
    key = jax.random.PRNGKey(0)
    k_graph, k_feat, k_param = jax.random.split(key, 3)

    # Small synthetic problem (layers: GraphConv(16,32,relu), GraphConv(32,8)).
    n_nodes, in_feats, n_hidden, n_classes, n_layers = 64, 16, 32, 8, 1

    a_hat = build_normalized_adjacency(k_graph, n_nodes)
    features = jax.random.normal(k_feat, (n_nodes, in_feats), jnp.float32)
    params = init_gcn_params(k_param, in_feats, n_hidden, n_classes, n_layers)

    ref = gcn_forward_ref(a_hat, features, params)

    # Fused (VMEM-resident A_hat) path -- the one the benchmark shapes hit.
    forward = make_gcn_forward(a_hat, params)
    out = jax.block_until_ready(forward(features))
    assert out.shape == (n_nodes, n_classes), out.shape
    assert bool(jnp.all(jnp.isfinite(out)))
    assert bool(jnp.allclose(out, ref, atol=1e-1, rtol=1e-1)), float(
        jnp.max(jnp.abs(out - ref)))

    # Tiled large-graph fallback, forced at small size for a correctness check.
    forward_tiled = make_gcn_forward(a_hat, params, force_tiled=True)
    out_t = jax.block_until_ready(forward_tiled(features))
    assert out_t.shape == (n_nodes, n_classes), out_t.shape
    assert bool(jnp.allclose(out_t, ref, atol=1e-1, rtol=1e-1)), float(
        jnp.max(jnp.abs(out_t - ref)))

    print("KERNEL_OK")
</pallas_src>

<mosaic_0001>
module attributes {stable_mosaic.version = 11 : i64} {
  func.func @_probe_copy_kernel(%arg0: i32, %arg1: memref<8x128xf32, #tpu.memory_space<vmem>>, %arg2: memref<8x128xf32, #tpu.memory_space<vmem>>) attributes {dimension_semantics = [#tpu.dimension_semantics<arbitrary>], iteration_bounds = array<i64: 1>, scalar_prefetch = 0 : i64, scratch_operands = 0 : i64, tpu.core_type = #tpu.core_type<tc>, window_params = [{pipeline_mode = #tpu.pipeline_mode<synchronous>, transform_indices = @transform_0, window_bounds = array<i64: 8, 128>}, {pipeline_mode = #tpu.pipeline_mode<synchronous>, transform_indices = @transform_1, window_bounds = array<i64: 8, 128>}]} {
    %c0 = arith.constant 0 : index
    %c0_0 = arith.constant 0 : index
    %0 = vector.load %arg1[%c0, %c0_0] : memref<8x128xf32, #tpu.memory_space<vmem>>, vector<8x128xf32>
    %c0_1 = arith.constant 0 : index
    %c0_2 = arith.constant 0 : index
    %1 = vector.load %arg2[%c0_1, %c0_2] : memref<8x128xf32, #tpu.memory_space<vmem>>, vector<8x128xf32>
    tpu.vector_store %arg2[%c0_1, %c0_2], %0 {strides = array<i32>} : memref<8x128xf32, #tpu.memory_space<vmem>>, vector<8x128xf32>,
    return
  }
  func.func @transform_0(%arg0: i32) -> (i32, i32) {
    %c0_i32 = arith.constant 0 : i32
    %c0_i32_0 = arith.constant 0 : i32
    %c0_i32_1 = arith.constant 0 : i32
    return %c0_i32, %c0_i32_0 : i32, i32
  }
  func.func @transform_1(%arg0: i32) -> (i32, i32) {
    %c0_i32 = arith.constant 0 : i32
    %c0_i32_0 = arith.constant 0 : i32
    %c0_i32_1 = arith.constant 0 : i32
    return %c0_i32, %c0_i32_0 : i32, i32
  }
}

module attributes {stable_mosaic.version = 11 : i64} {
  func.func @_gcn_fused_kernel(%arg0: i32, %arg1: memref<128x128xbf16, #tpu.memory_space<vmem>>, %arg2: memref<128x128xbf16, #tpu.memory_space<vmem>>, %arg3: memref<128x128xbf16, #tpu.memory_space<vmem>>, %arg4: memref<128x128xbf16, #tpu.memory_space<vmem>>, %arg5: memref<1x128xf32, #tpu.memory_space<vmem>>, %arg6: memref<1x128xf32, #tpu.memory_space<vmem>>, %arg7: memref<128x128xf32, #tpu.memory_space<vmem>>) attributes {dimension_semantics = [#tpu.dimension_semantics<arbitrary>], iteration_bounds = array<i64: 1>, scalar_prefetch = 0 : i64, scratch_operands = 0 : i64, tpu.core_type = #tpu.core_type<tc>, window_params = [{pipeline_mode = #tpu.pipeline_mode<synchronous>, transform_indices = @transform_0, window_bounds = array<i64: 128, 128>}, {pipeline_mode = #tpu.pipeline_mode<synchronous>, transform_indices = @transform_1, window_bounds = array<i64: 128, 128>}, {pipeline_mode = #tpu.pipeline_mode<synchronous>, transform_indices = @transform_2, window_bounds = array<i64: 128, 128>}, {pipeline_mode = #tpu.pipeline_mode<synchronous>, transform_indices = @transform_3, window_bounds = array<i64: 128, 128>}, {pipeline_mode = #tpu.pipeline_mode<synchronous>, transform_indices = @transform_4, window_bounds = array<i64: 1, 128>}, {pipeline_mode = #tpu.pipeline_mode<synchronous>, transform_indices = @transform_5, window_bounds = array<i64: 1, 128>}, {pipeline_mode = #tpu.pipeline_mode<synchronous>, transform_indices = @transform_6, window_bounds = array<i64: 128, 128>}]} {
    %c0 = arith.constant 0 : index
    %c0_0 = arith.constant 0 : index
    %0 = vector.load %arg1[%c0, %c0_0] : memref<128x128xbf16, #tpu.memory_space<vmem>>, vector<128x128xbf16>
    %c0_1 = arith.constant 0 : index
    %c0_2 = arith.constant 0 : index
    %1 = vector.load %arg2[%c0_1, %c0_2] : memref<128x128xbf16, #tpu.memory_space<vmem>>, vector<128x128xbf16>
    %c0_3 = arith.constant 0 : index
    %c0_4 = arith.constant 0 : index
    %2 = vector.load %arg3[%c0_3, %c0_4] : memref<128x128xbf16, #tpu.memory_space<vmem>>, vector<128x128xbf16>
    %c0_5 = arith.constant 0 : index
    %c0_6 = arith.constant 0 : index
    %3 = vector.load %arg5[%c0_5, %c0_6] : memref<1x128xf32, #tpu.memory_space<vmem>>, vector<1x128xf32>
    %cst = arith.constant dense<0.000000e+00> : vector<128x128xf32>
    %4 = tpu.matmul %0, %1, %cst {dimension_numbers = #tpu.dot_dimension_numbers<[1], [0], [0], [1], [0, 0, 1, 1], [], []>} : vector<128x128xbf16>, vector<128x128xbf16>, vector<128x128xf32> -> vector<128x128xf32>
    %5 = arith.truncf %4 : vector<128x128xf32> to vector<128x128xbf16>
    %cst_7 = arith.constant dense<0.000000e+00> : vector<128x128xf32>
    %6 = tpu.matmul %5, %2, %cst_7 {dimension_numbers = #tpu.dot_dimension_numbers<[1], [0], [0], [1], [0, 0, 1, 1], [], []>} : vector<128x128xbf16>, vector<128x128xbf16>, vector<128x128xf32> -> vector<128x128xf32>
    %7 = vector.broadcast %3 : vector<1x128xf32> to vector<128x128xf32>
    %8 = arith.addf %6, %7 : vector<128x128xf32>
    %cst_8 = arith.constant 0.000000e+00 : f32
    %9 = vector.broadcast %cst_8 : f32 to vector<128x128xf32>
    %10 = arith.maximumf %8, %9 : vector<128x128xf32>
    %11 = arith.truncf %10 : vector<128x128xf32> to vector<128x128xbf16>
    %c0_9 = arith.constant 0 : index
    %c0_10 = arith.constant 0 : index
    %12 = vector.load %arg4[%c0_9, %c0_10] : memref<128x128xbf16, #tpu.memory_space<vmem>>, vector<128x128xbf16>
    %c0_11 = arith.constant 0 : index
    %c0_12 = arith.constant 0 : index
    %13 = vector.load %arg6[%c0_11, %c0_12] : memref<1x128xf32, #tpu.memory_space<vmem>>, vector<1x128xf32>
    %cst_13 = arith.constant dense<0.000000e+00> : vector<128x128xf32>
    %14 = tpu.matmul %0, %11, %cst_13 {dimension_numbers = #tpu.dot_dimension_numbers<[1], [0], [0], [1], [0, 0, 1, 1], [], []>} : vector<128x128xbf16>, vector<128x128xbf16>, vector<128x128xf32> -> vector<128x128xf32>
    %15 = arith.truncf %14 : vector<128x128xf32> to vector<128x128xbf16>
    %cst_14 = arith.constant dense<0.000000e+00> : vector<128x128xf32>
    %16 = tpu.matmul %15, %12, %cst_14 {dimension_numbers = #tpu.dot_dimension_numbers<[1], [0], [0], [1], [0, 0, 1, 1], [], []>} : vector<128x128xbf16>, vector<128x128xbf16>, vector<128x128xf32> -> vector<128x128xf32>
    %17 = vector.broadcast %13 : vector<1x128xf32> to vector<128x128xf32>
    %18 = arith.addf %16, %17 : vector<128x128xf32>
    %c0_15 = arith.constant 0 : index
    %c0_16 = arith.constant 0 : index
    %19 = vector.load %arg7[%c0_15, %c0_16] : memref<128x128xf32, #tpu.memory_space<vmem>>, vector<128x128xf32>
    tpu.vector_store %arg7[%c0_15, %c0_16], %18 {strides = array<i32>} : memref<128x128xf32, #tpu.memory_space<vmem>>, vector<128x128xf32>,
    return
  }
  func.func @transform_0(%arg0: i32) -> (i32, i32) {
    %c0_i32 = arith.constant 0 : i32
    %c0_i32_0 = arith.constant 0 : i32
    %c0_i32_1 = arith.constant 0 : i32
    return %c0_i32, %c0_i32_0 : i32, i32
  }
  func.func @transform_1(%arg0: i32) -> (i32, i32) {
    %c0_i32 = arith.constant 0 : i32
    %c0_i32_0 = arith.constant 0 : i32
    %c0_i32_1 = arith.constant 0 : i32
    return %c0_i32, %c0_i32_0 : i32, i32
  }
  func.func @transform_2(%arg0: i32) -> (i32, i32) {
    %c0_i32 = arith.constant 0 : i32
    %c0_i32_0 = arith.constant 0 : i32
    %c0_i32_1 = arith.constant 0 : i32
    return %c0_i32, %c0_i32_0 : i32, i32
  }
  func.func @transform_3(%arg0: i32) -> (i32, i32) {
    %c0_i32 = arith.constant 0 : i32
    %c0_i32_0 = arith.constant 0 : i32
    %c0_i32_1 = arith.constant 0 : i32
    return %c0_i32, %c0_i32_0 : i32, i32
  }
  func.func @transform_4(%arg0: i32) -> (i32, i32) {
    %c0_i32 = arith.constant 0 : i32
    %c0_i32_0 = arith.constant 0 : i32
    %c0_i32_1 = arith.constant 0 : i32
    return %c0_i32, %c0_i32_0 : i32, i32
  }
  func.func @transform_5(%arg0: i32) -> (i32, i32) {
    %c0_i32 = arith.constant 0 : i32
    %c0_i32_0 = arith.constant 0 : i32
    %c0_i32_1 = arith.constant 0 : i32
    return %c0_i32, %c0_i32_0 : i32, i32
  }
  func.func @transform_6(%arg0: i32) -> (i32, i32) {
    %c0_i32 = arith.constant 0 : i32
    %c0_i32_0 = arith.constant 0 : i32
    %c0_i32_1 = arith.constant 0 : i32
    return %c0_i32, %c0_i32_0 : i32, i32
  }
}

</mosaic_0001>

<llo_original>
// kernel: tpu_custom_call.1
$region0: #{tpu_custom_call.1}
  #allocation0 [shape = 'u32[]', space=smem, size = 0x4, offset = 0x4, fixed_abs, tag = 'smem constant byte address 0x4 - core index']
  #allocation1 [shape = 'u32[144,128]{1,0:T(1,128)}', space=vmem, size = 0x12000, scoped, tag = 'internal scratch']
  %s0 = inlined_call_operand.hbm [shape: f32[8,128], index: 0, kind: input, shape index: {}]
  %s1 = inlined_call_operand.hbm [shape: f32[8,128], index: 1, kind: output, shape index: {}]
  %s2 = sld [smem:[#allocation0]]
  $region18: #{tpu_custom_call.1} parent=0
    _
  %s4 = ssub.s32 1, %s2
  %s5 = scalar_select 0, %s4, %s2
  $region1: #{tpu_custom_call.1} parent=0
    #allocation2 [shape = 'u8[4096]{0}', space=vmem, size = 0x1000, scoped, tag = 'input window, operand 0, single buffered']
    #allocation3 [shape = 's32[1]{0}', space=sflag, size = 0x4, scoped, tag = 'scoped memory for tpu_custom_call.1']
    #allocation4 [shape = 's32[1]{0}', space=sflag, size = 0x4, scoped, tag = 'scoped memory for tpu_custom_call.1']
    #allocation5 [shape = 'u8[4096]{0}', space=vmem, size = 0x1000, scoped, tag = 'output window, operand 0, single buffered']
    %6 = vsyncpa [#allocation3], 0
    %7 = vsyncpa [#allocation4], 0
    // Predicated region
    $region2: #{tpu_custom_call.1} parent=1 // pred_check
      _
    $region3: #{tpu_custom_call.1} parent=1 // pred_check_branch
      %9 = sbr.rel (0) target = $region5
    $region4: #{tpu_custom_call.1} parent=1 // pred_region
      %s11 = ssub.s32 128, 128
      %12 = vsyncadd [#allocation3], %s11
      %s14 = sshll.u32 [#allocation2], 4
      %s15 = int_to_ptr.vmem [resolvable:$true] %s14
      %17 = dma.hbm_to_vmem [thread:$0]  %s0, 128, %s15, [#allocation3]
    $region5: #{tpu_custom_call.1} parent=1 // pred_fallthru
      _
    // Predicated region
    $region6: #{tpu_custom_call.1} parent=1 // pred_check
      _
    $region7: #{tpu_custom_call.1} parent=1 // pred_check_branch
      %19 = sbr.rel (0) target = $region9
    $region8: #{tpu_custom_call.1} parent=1 // pred_region
      %20 = dma.done [#allocation3], 128
    $region9: #{tpu_custom_call.1} parent=1 // pred_fallthru
      _
    %v21 = vld [vmem:[#allocation2] sm:$0xff]
    %22 = vst [vmem:[#allocation5] sm:$0xff] %v21
    // Predicated region
    $region10: #{tpu_custom_call.1} parent=1 // pred_check
      _
    $region11: #{tpu_custom_call.1} parent=1 // pred_check_branch
      %24 = sbr.rel (0) target = $region13
    $region12: #{tpu_custom_call.1} parent=1 // pred_region
      %s26 = ssub.s32 128, 128
      %27 = vsyncadd [#allocation4], %s26
      %s29 = sshll.u32 [#allocation5], 4
      %s30 = int_to_ptr.vmem [resolvable:$true] %s29
      %32 = dma.vmem_to_hbm [thread:$0]  %s30, 128, %s1, [#allocation4]
    $region13: #{tpu_custom_call.1} parent=1 // pred_fallthru
      _
    // Predicated region
    $region14: #{tpu_custom_call.1} parent=1 // pred_check
      _
    $region15: #{tpu_custom_call.1} parent=1 // pred_check_branch
      %34 = sbr.rel (0) target = $region17
    $region16: #{tpu_custom_call.1} parent=1 // pred_region
      %35 = dma.done [#allocation4], 128
    $region17: #{tpu_custom_call.1} parent=1 // pred_fallthru
      _
    %36 = vsyncpa [#allocation3], 1
    %37 = vsyncpa [#allocation4], 1

// kernel: _gcn_apply.1
$region0: #{_gcn_apply.1}
  #allocation0 [shape = 'u32[]', space=smem, size = 0x4, offset = 0x4, fixed_abs, tag = 'smem constant byte address 0x4 - core index']
  #allocation1 [shape = 'u32[144,128]{1,0:T(1,128)}', space=vmem, size = 0x12000, scoped, tag = 'internal scratch']
  %s0 = inlined_call_operand.vmem [shape: bf16[128,128], index: 0, kind: input, shape index: {}]
  %s1 = inlined_call_operand.vmem [shape: bf16[128,128], index: 1, kind: input, shape index: {}]
  %s2 = inlined_call_operand.vmem [shape: bf16[128,128], index: 2, kind: input, shape index: {}]
  %s3 = inlined_call_operand.hbm [shape: bf16[128,128], index: 3, kind: input, shape index: {}]
  %s4 = inlined_call_operand.vmem [shape: f32[1,128], index: 4, kind: input, shape index: {}]
  %s5 = inlined_call_operand.vmem [shape: f32[1,128], index: 5, kind: input, shape index: {}]
  %s6 = inlined_call_operand.vmem [shape: f32[128,128], index: 6, kind: output, shape index: {}]
  %s7 = sld [smem:[#allocation0]]
  $region38: #{_gcn_apply.1} parent=0
    _
  %s9 = ssub.s32 1, %s7
  %s10 = scalar_select 0, %s9, %s7
  $region1: #{_gcn_apply.1} parent=0
    #allocation2 [shape = 'u8[32768]{0}', space=vmem, size = 0x8000, scoped, tag = 'input window, operand 3, single buffered']
    #allocation3 [shape = 's32[1]{0}', space=sflag, size = 0x4, scoped, tag = 'scoped memory for _gcn_apply.1']
    %11 = vsyncpa [#allocation3], 0
    // Predicated region
    $region2: #{_gcn_apply.1} parent=1 // pred_check
      _
    $region3: #{_gcn_apply.1} parent=1 // pred_check_branch
      %13 = sbr.rel (0) target = $region5
    $region4: #{_gcn_apply.1} parent=1 // pred_region
      _
    $region5: #{_gcn_apply.1} parent=1 // pred_fallthru
      _
    // Predicated region
    $region6: #{_gcn_apply.1} parent=1 // pred_check
      _
    $region7: #{_gcn_apply.1} parent=1 // pred_check_branch
      %15 = sbr.rel (0) target = $region9
    $region8: #{_gcn_apply.1} parent=1 // pred_region
      _
    $region9: #{_gcn_apply.1} parent=1 // pred_fallthru
      _
    // Predicated region
    $region10: #{_gcn_apply.1} parent=1 // pred_check
      _
    $region11: #{_gcn_apply.1} parent=1 // pred_check_branch
      %17 = sbr.rel (0) target = $region13
    $region12: #{_gcn_apply.1} parent=1 // pred_region
      _
    $region13: #{_gcn_apply.1} parent=1 // pred_fallthru
      _
    // Predicated region
    $region14: #{_gcn_apply.1} parent=1 // pred_check
      _
    $region15: #{_gcn_apply.1} parent=1 // pred_check_branch
      %19 = sbr.rel (0) target = $region17
    $region16: #{_gcn_apply.1} parent=1 // pred_region
      %s21 = ssub.s32 1024, 1024
      %22 = vsyncadd [#allocation3], %s21
      %s23 = sshll.u32 [#allocation2], 4
      %s24 = int_to_ptr.vmem [resolvable:$true] %s23
      %29 = dma.hbm_to_vmem [thread:$0]  %s3, 1024, %s24, [#allocation3], 64, 64, 4
    $region17: #{_gcn_apply.1} parent=1 // pred_fallthru
      _
    // Predicated region
    $region18: #{_gcn_apply.1} parent=1 // pred_check
      _
    $region19: #{_gcn_apply.1} parent=1 // pred_check_branch
      %31 = sbr.rel (0) target = $region21
    $region20: #{_gcn_apply.1} parent=1 // pred_region
      _
    $region21: #{_gcn_apply.1} parent=1 // pred_fallthru
      _
    // Predicated region
    $region22: #{_gcn_apply.1} parent=1 // pred_check
      _
    $region23: #{_gcn_apply.1} parent=1 // pred_check_branch
      %33 = sbr.rel (0) target = $region25
    $region24: #{_gcn_apply.1} parent=1 // pred_region
      _
    $region25: #{_gcn_apply.1} parent=1 // pred_fallthru
      _
    // Predicated region
    $region26: #{_gcn_apply.1} parent=1 // pred_check
      _
    $region27: #{_gcn_apply.1} parent=1 // pred_check_branch
      %35 = sbr.rel (0) target = $region29
    $region28: #{_gcn_apply.1} parent=1 // pred_region
      %36 = dma.done [#allocation3], 1024
    $region29: #{_gcn_apply.1} parent=1 // pred_fallthru
      _
    %v38 = vld [vmem:[%s0] sm:$0xf]
    %v39 = vld [vmem:[%s0 + $0x4] sm:$0xf]
    %v40 = vld [vmem:[%s0 + $0x8] sm:$0xf]
    %v41 = vld [vmem:[%s0 + $0xc] sm:$0xf]
    %v42 = vld [vmem:[%s0 + $0x10] sm:$0xf]
    %v43 = vld [vmem:[%s0 + $0x14] sm:$0xf]
    %v44 = vld [vmem:[%s0 + $0x18] sm:$0xf]
    %v45 = vld [vmem:[%s0 + $0x1c] sm:$0xf]
    %v46 = vld [vmem:[%s0 + $0x20] sm:$0xf]
    %v47 = vld [vmem:[%s0 + $0x24] sm:$0xf]
    %v48 = vld [vmem:[%s0 + $0x28] sm:$0xf]
    %v49 = vld [vmem:[%s0 + $0x2c] sm:$0xf]
    %v50 = vld [vmem:[%s0 + $0x30] sm:$0xf]
    %v51 = vld [vmem:[%s0 + $0x34] sm:$0xf]
    %v52 = vld [vmem:[%s0 + $0x38] sm:$0xf]
    %v53 = vld [vmem:[%s0 + $0x3c] sm:$0xf]
    %v54 = vld [vmem:[%s1] sm:$0xf]
    %v55 = vld [vmem:[%s1 + $0x4] sm:$0xf]
    %v56 = vld [vmem:[%s1 + $0x8] sm:$0xf]
    %v57 = vld [vmem:[%s1 + $0xc] sm:$0xf]
    %v58 = vld [vmem:[%s1 + $0x10] sm:$0xf]
    %v59 = vld [vmem:[%s1 + $0x14] sm:$0xf]
    %v60 = vld [vmem:[%s1 + $0x18] sm:$0xf]
    %v61 = vld [vmem:[%s1 + $0x1c] sm:$0xf]
    %v62 = vld [vmem:[%s1 + $0x20] sm:$0xf]
    %v63 = vld [vmem:[%s1 + $0x24] sm:$0xf]
    %v64 = vld [vmem:[%s1 + $0x28] sm:$0xf]
    %v65 = vld [vmem:[%s1 + $0x2c] sm:$0xf]
    %v66 = vld [vmem:[%s1 + $0x30] sm:$0xf]
    %v67 = vld [vmem:[%s1 + $0x34] sm:$0xf]
    %v68 = vld [vmem:[%s1 + $0x38] sm:$0xf]
    %v69 = vld [vmem:[%s1 + $0x3c] sm:$0xf]
    %v70 = vld [vmem:[%s2] sm:$0xf]
    %v71 = vld [vmem:[%s2 + $0x4] sm:$0xf]
    %v72 = vld [vmem:[%s2 + $0x8] sm:$0xf]
    %v73 = vld [vmem:[%s2 + $0xc] sm:$0xf]
    %v74 = vld [vmem:[%s2 + $0x10] sm:$0xf]
    %v75 = vld [vmem:[%s2 + $0x14] sm:$0xf]
    %v76 = vld [vmem:[%s2 + $0x18] sm:$0xf]
    %v77 = vld [vmem:[%s2 + $0x1c] sm:$0xf]
    %v78 = vld [vmem:[%s2 + $0x20] sm:$0xf]
    %v79 = vld [vmem:[%s2 + $0x24] sm:$0xf]
    %v80 = vld [vmem:[%s2 + $0x28] sm:$0xf]
    %v81 = vld [vmem:[%s2 + $0x2c] sm:$0xf]
    %v82 = vld [vmem:[%s2 + $0x30] sm:$0xf]
    %v83 = vld [vmem:[%s2 + $0x34] sm:$0xf]
    %v84 = vld [vmem:[%s2 + $0x38] sm:$0xf]
    %v85 = vld [vmem:[%s2 + $0x3c] sm:$0xf]
    %v86 = vld [vmem:[%s4] sm:$0x1]
    %v103 = vunpack.c.l.b16 %v38
    %v104 = vunpack.c.l.b16 %v39
    %v105 = vunpack.c.l.b16 %v40
    %v106 = vunpack.c.l.b16 %v41
    %v107 = vunpack.c.l.b16 %v42
    %v108 = vunpack.c.l.b16 %v43
    %v109 = vunpack.c.l.b16 %v44
    %v110 = vunpack.c.l.b16 %v45
    %v111 = vunpack.c.l.b16 %v46
    %v112 = vunpack.c.l.b16 %v47
    %v113 = vunpack.c.l.b16 %v48
    %v114 = vunpack.c.l.b16 %v49
    %v115 = vunpack.c.l.b16 %v50
    %v116 = vunpack.c.l.b16 %v51
    %v117 = vunpack.c.l.b16 %v52
    %v118 = vunpack.c.l.b16 %v53
    %v119 = vpack.c.b16 %v104, %v103
    %v120 = vpack.c.b16 %v106, %v105
    %v121 = vpack.c.b16 %v108, %v107
    %v122 = vpack.c.b16 %v110, %v109
    %v123 = vpack.c.b16 %v112, %v111
    %v124 = vpack.c.b16 %v114, %v113
    %v125 = vpack.c.b16 %v116, %v115
    %v126 = vpack.c.b16 %v118, %v117
    %v151 = vunpack.c.l.b16 %v54
    %v152 = vunpack.c.l.b16 %v55
    %v153 = vunpack.c.l.b16 %v56
    %v154 = vunpack.c.l.b16 %v57
    %v155 = vunpack.c.l.b16 %v58
    %v156 = vunpack.c.l.b16 %v59
    %v157 = vunpack.c.l.b16 %v60
    %v158 = vunpack.c.l.b16 %v61
    %v159 = vunpack.c.l.b16 %v62
    %v160 = vunpack.c.l.b16 %v63
    %v161 = vunpack.c.l.b16 %v64
    %v162 = vunpack.c.l.b16 %v65
    %v163 = vunpack.c.l.b16 %v66
    %v164 = vunpack.c.l.b16 %v67
    %v165 = vunpack.c.l.b16 %v68
    %v166 = vunpack.c.l.b16 %v69
    %v167 = vpack.c.b16 %v152, %v151
    %v168 = vpack.c.b16 %v154, %v153
    %v169 = vpack.c.b16 %v156, %v155
    %v170 = vpack.c.b16 %v158, %v157
    %v171 = vpack.c.b16 %v160, %v159
    %v172 = vpack.c.b16 %v162, %v161
    %v173 = vpack.c.b16 %v164, %v163
    %v174 = vpack.c.b16 %v166, %v165
    %183 = vmatprep.subr.bf16.mxu0 0
    %184 = vmatpush1.bf16.msra.mxu0 %v167
    %185 = vmatprep.subr.bf16.mxu0 0
    %186 = vmatpush1.bf16.msra.mxu0 %v168
    %187 = vmatprep.subr.bf16.mxu0 0
    %188 = vmatpush1.bf16.msra.mxu0 %v169
    %189 = vmatprep.subr.bf16.mxu0 0
    %190 = vmatpush1.bf16.msra.mxu0 %v170
    %191 = vmatprep.subr.bf16.mxu0 0
    %192 = vmatpush1.bf16.msra.mxu0 %v171
    %193 = vmatprep.subr.bf16.mxu0 0
    %194 = vmatpush1.bf16.msra.mxu0 %v172
    %195 = vmatprep.subr.bf16.mxu0 0
    %196 = vmatpush1.bf16.msra.mxu0 %v173
    %197 = vmatprep.subr.bf16.mxu0 0
    %198 = vmatpush1.bf16.msra.mxu0 %v174
    %199 = vmatprep.subr.bf16.mxu0 0
    %200 = vmatpush1.bf16.msra.mxu0 0
    %201 = vmatprep.subr.bf16.mxu0 0
    %202 = vmatpush1.bf16.msra.mxu0 0
    %203 = vmatprep.subr.bf16.mxu0 0
    %204 = vmatpush1.bf16.msra.mxu0 0
    %205 = vmatprep.subr.bf16.mxu0 0
    %206 = vmatpush1.bf16.msra.mxu0 0
    %207 = vmatprep.subr.bf16.mxu0 0
    %208 = vmatpush1.bf16.msra.mxu0 0
    %209 = vmatprep.subr.bf16.mxu0 0
    %210 = vmatpush1.bf16.msra.mxu0 0
    %211 = vmatprep.subr.bf16.mxu0 0
    %212 = vmatpush1.bf16.msra.mxu0 0
    %213 = vmatprep.subr.bf16.mxu0 0
    %214 = vmatpush1.bf16.msra.mxu0 0
    %215 = vmatprep.mubr.bf16.mxu0 0
    %216 = vmatmul.mubr.bf16.gmra.mrb[0].mxu0 %v119
    %v217 = vpop.f32.mrb[0].mxu0
    %v218 = vadd.f32 0.0, %v217
    %v219 = vpop.f32.mrb[0].mxu0
    %v220 = vpop.f32.mrb[0].mxu0
    %v221 = vadd.f32 0.0, %v220
    %v222 = vpop.f32.mrb[0].mxu0
    %223 = vmatprep.mubr.bf16.mxu0 0
    %224 = vmatmul.mubr.bf16.gmra.mrb[0].mxu0 %v120
    %v225 = vpop.f32.mrb[0].mxu0
    %v226 = vadd.f32 0.0, %v225
    %v227 = vpop.f32.mrb[0].mxu0
    %v228 = vpop.f32.mrb[0].mxu0
    %v229 = vadd.f32 0.0, %v228
    %v230 = vpop.f32.mrb[0].mxu0
    %231 = vmatprep.mubr.bf16.mxu0 0
    %232 = vmatmul.mubr.bf16.gmra.mrb[0].mxu0 %v121
    %v233 = vpop.f32.mrb[0].mxu0
    %v234 = vadd.f32 0.0, %v233
    %v235 = vpop.f32.mrb[0].mxu0
    %v236 = vpop.f32.mrb[0].mxu0
    %v237 = vadd.f32 0.0, %v236
    %v238 = vpop.f32.mrb[0].mxu0
    %239 = vmatprep.mubr.bf16.mxu0 0
    %240 = vmatmul.mubr.bf16.gmra.mrb[0].mxu0 %v122
    %v241 = vpop.f32.mrb[0].mxu0
    %v242 = vadd.f32 0.0, %v241
    %v243 = vpop.f32.mrb[0].mxu0
    %v244 = vpop.f32.mrb[0].mxu0
    %v245 = vadd.f32 0.0, %v244
    %v246 = vpop.f32.mrb[0].mxu0
    %247 = vmatprep.mubr.bf16.mxu0 0
    %248 = vmatmul.mubr.bf16.gmra.mrb[0].mxu0 %v123
    %v249 = vpop.f32.mrb[0].mxu0
    %v250 = vadd.f32 0.0, %v249
    %v251 = vpop.f32.mrb[0].mxu0
    %v252 = vpop.f32.mrb[0].mxu0
    %v253 = vadd.f32 0.0, %v252
    %v254 = vpop.f32.mrb[0].mxu0
    %255 = vmatprep.mubr.bf16.mxu0 0
    %256 = vmatmul.mubr.bf16.gmra.mrb[0].mxu0 %v124
    %v257 = vpop.f32.mrb[0].mxu0
    %v258 = vadd.f32 0.0, %v257
    %v259 = vpop.f32.mrb[0].mxu0
    %v260 = vpop.f32.mrb[0].mxu0
    %v261 = vadd.f32 0.0, %v260
    %v262 = vpop.f32.mrb[0].mxu0
    %263 = vmatprep.mubr.bf16.mxu0 0
    %264 = vmatmul.mubr.bf16.gmra.mrb[0].mxu0 %v125
    %v265 = vpop.f32.mrb[0].mxu0
    %v266 = vadd.f32 0.0, %v265
    %v267 = vpop.f32.mrb[0].mxu0
    %v268 = vpop.f32.mrb[0].mxu0
    %v269 = vadd.f32 0.0, %v268
    %v270 = vpop.f32.mrb[0].mxu0
    %271 = vmatprep.mubr.bf16.mxu0 0
    %272 = vmatmul.mubr.bf16.gmra.mrb[0].mxu0 %v126
    %v273 = vpop.f32.mrb[0].mxu0
    %v274 = vadd.f32 0.0, %v273
    %v275 = vpop.f32.mrb[0].mxu0
    %v276 = vpop.f32.mrb[0].mxu0
    %v277 = vadd.f32 0.0, %v276
    %v278 = vpop.f32.mrb[0].mxu0
    %279 = vdwg.mxu0
    %v280 = vpack.c.bf16 %v221, %v218
    %v281 = vpack.c.bf16 %v229, %v226
    %v282 = vpack.c.bf16 %v237, %v234
    %v283 = vpack.c.bf16 %v245, %v242
    %v284 = vpack.c.bf16 %v253, %v250
    %v285 = vpack.c.bf16 %v261, %v258
    %v286 = vpack.c.bf16 %v269, %v266
    %v287 = vpack.c.bf16 %v277, %v274
    %v289 = vlaneseq
    %v290 = vshrl.u32 %v289, 7
    %v291 = vsub.s32 0, %v290
    %v292 = vrot.slane %v86, %v291
    %v310 = vunpack.c.l.b16 %v70
    %v311 = vunpack.c.l.b16 %v71
    %v312 = vunpack.c.l.b16 %v72
    %v313 = vunpack.c.l.b16 %v73
    %v314 = vunpack.c.l.b16 %v74
    %v315 = vunpack.c.l.b16 %v75
    %v316 = vunpack.c.l.b16 %v76
    %v317 = vunpack.c.l.b16 %v77
    %v318 = vunpack.c.l.b16 %v78
    %v319 = vunpack.c.l.b16 %v79
    %v320 = vunpack.c.l.b16 %v80
    %v321 = vunpack.c.l.b16 %v81
    %v322 = vunpack.c.l.b16 %v82
    %v323 = vunpack.c.l.b16 %v83
    %v324 = vunpack.c.l.b16 %v84
    %v325 = vunpack.c.l.b16 %v85
    %v326 = vpack.c.b16 %v311, %v310
    %v327 = vpack.c.b16 %v313, %v312
    %v328 = vpack.c.b16 %v315, %v314
    %v329 = vpack.c.b16 %v317, %v316
    %v330 = vpack.c.b16 %v319, %v318
    %v331 = vpack.c.b16 %v321, %v320
    %v332 = vpack.c.b16 %v323, %v322
    %v333 = vpack.c.b16 %v325, %v324
    %342 = vmatprep.subr.bf16.mxu0 0
    %343 = vmatpush1.bf16.msra.mxu0 %v326
    %344 = vmatprep.subr.bf16.mxu0 0
    %345 = vmatpush1.bf16.msra.mxu0 %v327
    %346 = vmatprep.subr.bf16.mxu0 0
    %347 = vmatpush1.bf16.msra.mxu0 %v328
    %348 = vmatprep.subr.bf16.mxu0 0
    %349 = vmatpush1.bf16.msra.mxu0 %v329
    %350 = vmatprep.subr.bf16.mxu0 0
    %351 = vmatpush1.bf16.msra.mxu0 %v330
    %352 = vmatprep.subr.bf16.mxu0 0
    %353 = vmatpush1.bf16.msra.mxu0 %v331
    %354 = vmatprep.subr.bf16.mxu0 0
    %355 = vmatpush1.bf16.msra.mxu0 %v332
    %356 = vmatprep.subr.bf16.mxu0 0
    %357 = vmatpush1.bf16.msra.mxu0 %v333
    %358 = vmatprep.subr.bf16.mxu0 0
    %359 = vmatpush1.bf16.msra.mxu0 0
    %360 = vmatprep.subr.bf16.mxu0 0
    %361 = vmatpush1.bf16.msra.mxu0 0
    %362 = vmatprep.subr.bf16.mxu0 0
    %363 = vmatpush1.bf16.msra.mxu0 0
    %364 = vmatprep.subr.bf16.mxu0 0
    %365 = vmatpush1.bf16.msra.mxu0 0
    %366 = vmatprep.subr.bf16.mxu0 0
    %367 = vmatpush1.bf16.msra.mxu0 0
    %368 = vmatprep.subr.bf16.mxu0 0
    %369 = vmatpush1.bf16.msra.mxu0 0
    %370 = vmatprep.subr.bf16.mxu0 0
    %371 = vmatpush1.bf16.msra.mxu0 0
    %372 = vmatprep.subr.bf16.mxu0 0
    %373 = vmatpush1.bf16.msra.mxu0 0
    %374 = vmatprep.mubr.bf16.mxu0 0
    %375 = vmatmul.mubr.bf16.gmra.mrb[0].mxu0 %v280
    %v376 = vpop.f32.mrb[0].mxu0
    %v377 = vadd.f32 %v292, %v376
    %v378 = vpop.f32.mrb[0].mxu0
    %v379 = vpop.f32.mrb[0].mxu0
    %v380 = vadd.f32 %v292, %v379
    %v381 = vpop.f32.mrb[0].mxu0
    %382 = vmatprep.mubr.bf16.mxu0 0
    %383 = vmatmul.mubr.bf16.gmra.mrb[0].mxu0 %v281
    %v384 = vpop.f32.mrb[0].mxu0
    %v385 = vadd.f32 %v292, %v384
    %v386 = vpop.f32.mrb[0].mxu0
    %v387 = vpop.f32.mrb[0].mxu0
    %v388 = vadd.f32 %v292, %v387
    %v389 = vpop.f32.mrb[0].mxu0
    %390 = vmatprep.mubr.bf16.mxu0 0
    %391 = vmatmul.mubr.bf16.gmra.mrb[0].mxu0 %v282
    %v392 = vpop.f32.mrb[0].mxu0
    %v393 = vadd.f32 %v292, %v392
    %v394 = vpop.f32.mrb[0].mxu0
    %v395 = vpop.f32.mrb[0].mxu0
    %v396 = vadd.f32 %v292, %v395
    %v397 = vpop.f32.mrb[0].mxu0
    %398 = vmatprep.mubr.bf16.mxu0 0
    %399 = vmatmul.mubr.bf16.gmra.mrb[0].mxu0 %v283
    %v400 = vpop.f32.mrb[0].mxu0
    %v401 = vadd.f32 %v292, %v400
    %v402 = vpop.f32.mrb[0].mxu0
    %v403 = vpop.f32.mrb[0].mxu0
    %v404 = vadd.f32 %v292, %v403
    %v405 = vpop.f32.mrb[0].mxu0
    %406 = vmatprep.mubr.bf16.mxu0 0
    %407 = vmatmul.mubr.bf16.gmra.mrb[0].mxu0 %v284
    %v408 = vpop.f32.mrb[0].mxu0
    %v409 = vadd.f32 %v292, %v408
    %v410 = vpop.f32.mrb[0].mxu0
    %v411 = vpop.f32.mrb[0].mxu0
    %v412 = vadd.f32 %v292, %v411
    %v413 = vpop.f32.mrb[0].mxu0
    %414 = vmatprep.mubr.bf16.mxu0 0
    %415 = vmatmul.mubr.bf16.gmra.mrb[0].mxu0 %v285
    %v416 = vpop.f32.mrb[0].mxu0
    %v417 = vadd.f32 %v292, %v416
    %v418 = vpop.f32.mrb[0].mxu0
    %v419 = vpop.f32.mrb[0].mxu0
    %v420 = vadd.f32 %v292, %v419
    %v421 = vpop.f32.mrb[0].mxu0
    %422 = vmatprep.mubr.bf16.mxu0 0
    %423 = vmatmul.mubr.bf16.gmra.mrb[0].mxu0 %v286
    %v424 = vpop.f32.mrb[0].mxu0
    %v425 = vadd.f32 %v292, %v424
    %v426 = vpop.f32.mrb[0].mxu0
    %v427 = vpop.f32.mrb[0].mxu0
    %v428 = vadd.f32 %v292, %v427
    %v429 = vpop.f32.mrb[0].mxu0
    %430 = vmatprep.mubr.bf16.mxu0 0
    %431 = vmatmul.mubr.bf16.gmra.mrb[0].mxu0 %v287
    %v432 = vpop.f32.mrb[0].mxu0
    %v433 = vadd.f32 %v292, %v432
    %v434 = vpop.f32.mrb[0].mxu0
    %v435 = vpop.f32.mrb[0].mxu0
    %v436 = vadd.f32 %v292, %v435
    %v437 = vpop.f32.mrb[0].mxu0
    %438 = vdwg.mxu0
    %v439 = vmax.f32 %v377, 0.0
    %v440 = vmax.f32 %v380, 0.0
    %v441 = vmax.f32 %v385, 0.0
    %v442 = vmax.f32 %v388, 0.0
    %v443 = vmax.f32 %v393, 0.0
    %v444 = vmax.f32 %v396, 0.0
    %v445 = vmax.f32 %v401, 0.0
    %v446 = vmax.f32 %v404, 0.0
    %v447 = vmax.f32 %v409, 0.0
    %v448 = vmax.f32 %v412, 0.0
    %v449 = vmax.f32 %v417, 0.0
    %v450 = vmax.f32 %v420, 0.0
    %v451 = vmax.f32 %v425, 0.0
    %v452 = vmax.f32 %v428, 0.0
    %v453 = vmax.f32 %v433, 0.0
    %v454 = vmax.f32 %v436, 0.0
    %v455 = vpack.c.bf16 %v440, %v439
    %v456 = vpack.c.bf16 %v442, %v441
    %v457 = vpack.c.bf16 %v444, %v443
    %v458 = vpack.c.bf16 %v446, %v445
    %v459 = vpack.c.bf16 %v448, %v447
    %v460 = vpack.c.bf16 %v450, %v449
    %v461 = vpack.c.bf16 %v452, %v451
    %v462 = vpack.c.bf16 %v454, %v453
    %v463 = vld [vmem:[#allocation2] sm:$0xf]
    %v464 = vld [vmem:[#allocation2 + $0x4] sm:$0xf]
    %v465 = vld [vmem:[#allocation2 + $0x8] sm:$0xf]
    %v466 = vld [vmem:[#allocation2 + $0xc] sm:$0xf]
    %v467 = vld [vmem:[#allocation2 + $0x10] sm:$0xf]
    %v468 = vld [vmem:[#allocation2 + $0x14] sm:$0xf]
    %v469 = vld [vmem:[#allocation2 + $0x18] sm:$0xf]
    %v470 = vld [vmem:[#allocation2 + $0x1c] sm:$0xf]
    %v471 = vld [vmem:[#allocation2 + $0x20] sm:$0xf]
    %v472 = vld [vmem:[#allocation2 + $0x24] sm:$0xf]
    %v473 = vld [vmem:[#allocation2 + $0x28] sm:$0xf]
    %v474 = vld [vmem:[#allocation2 + $0x2c] sm:$0xf]
    %v475 = vld [vmem:[#allocation2 + $0x30] sm:$0xf]
    %v476 = vld [vmem:[#allocation2 + $0x34] sm:$0xf]
    %v477 = vld [vmem:[#allocation2 + $0x38] sm:$0xf]
    %v478 = vld [vmem:[#allocation2 + $0x3c] sm:$0xf]
    %v479 = vld [vmem:[%s5] sm:$0x1]
    %480 = vmatprep.subr.bf16.mxu0 0
    %481 = vmatpush1.bf16.msra.mxu0 %v455
    %482 = vmatprep.subr.bf16.mxu0 0
    %483 = vmatpush1.bf16.msra.mxu0 %v456
    %484 = vmatprep.subr.bf16.mxu0 0
    %485 = vmatpush1.bf16.msra.mxu0 %v457
    %486 = vmatprep.subr.bf16.mxu0 0
    %487 = vmatpush1.bf16.msra.mxu0 %v458
    %488 = vmatprep.subr.bf16.mxu0 0
    %489 = vmatpush1.bf16.msra.mxu0 %v459
    %490 = vmatprep.subr.bf16.mxu0 0
    %491 = vmatpush1.bf16.msra.mxu0 %v460
    %492 = vmatprep.subr.bf16.mxu0 0
    %493 = vmatpush1.bf16.msra.mxu0 %v461
    %494 = vmatprep.subr.bf16.mxu0 0
    %495 = vmatpush1.bf16.msra.mxu0 %v462
    %496 = vmatprep.subr.bf16.mxu0 0
    %497 = vmatpush1.bf16.msra.mxu0 0
    %498 = vmatprep.subr.bf16.mxu0 0
    %499 = vmatpush1.bf16.msra.mxu0 0
    %500 = vmatprep.subr.bf16.mxu0 0
    %501 = vmatpush1.bf16.msra.mxu0 0
    %502 = vmatprep.subr.bf16.mxu0 0
    %503 = vmatpush1.bf16.msra.mxu0 0
    %504 = vmatprep.subr.bf16.mxu0 0
    %505 = vmatpush1.bf16.msra.mxu0 0
    %506 = vmatprep.subr.bf16.mxu0 0
    %507 = vmatpush1.bf16.msra.mxu0 0
    %508 = vmatprep.subr.bf16.mxu0 0
    %509 = vmatpush1.bf16.msra.mxu0 0
    %510 = vmatprep.subr.bf16.mxu0 0
    %511 = vmatpush1.bf16.msra.mxu0 0
    %512 = vmatprep.mubr.bf16.mxu0 0
    %513 = vmatmul.mubr.bf16.gmra.mrb[0].mxu0 %v119
    %v514 = vpop.f32.mrb[0].mxu0
    %v515 = vadd.f32 0.0, %v514
    %v516 = vpop.f32.mrb[0].mxu0
    %v517 = vpop.f32.mrb[0].mxu0
    %v518 = vadd.f32 0.0, %v517
    %v519 = vpop.f32.mrb[0].mxu0
    %520 = vmatprep.mubr.bf16.mxu0 0
    %521 = vmatmul.mubr.bf16.gmra.mrb[0].mxu0 %v120
    %v522 = vpop.f32.mrb[0].mxu0
    %v523 = vadd.f32 0.0, %v522
    %v524 = vpop.f32.mrb[0].mxu0
    %v525 = vpop.f32.mrb[0].mxu0
    %v526 = vadd.f32 0.0, %v525
    %v527 = vpop.f32.mrb[0].mxu0
    %528 = vmatprep.mubr.bf16.mxu0 0
    %529 = vmatmul.mubr.bf16.gmra.mrb[0].mxu0 %v121
    %v530 = vpop.f32.mrb[0].mxu0
    %v531 = vadd.f32 0.0, %v530
    %v532 = vpop.f32.mrb[0].mxu0
    %v533 = vpop.f32.mrb[0].mxu0
    %v534 = vadd.f32 0.0, %v533
    %v535 = vpop.f32.mrb[0].mxu0
    %536 = vmatprep.mubr.bf16.mxu0 0
    %537 = vmatmul.mubr.bf16.gmra.mrb[0].mxu0 %v122
    %v538 = vpop.f32.mrb[0].mxu0
    %v539 = vadd.f32 0.0, %v538
    %v540 = vpop.f32.mrb[0].mxu0
    %v541 = vpop.f32.mrb[0].mxu0
    %v542 = vadd.f32 0.0, %v541
    %v543 = vpop.f32.mrb[0].mxu0
    %544 = vmatprep.mubr.bf16.mxu0 0
    %545 = vmatmul.mubr.bf16.gmra.mrb[0].mxu0 %v123
    %v546 = vpop.f32.mrb[0].mxu0
    %v547 = vadd.f32 0.0, %v546
    %v548 = vpop.f32.mrb[0].mxu0
    %v549 = vpop.f32.mrb[0].mxu0
    %v550 = vadd.f32 0.0, %v549
    %v551 = vpop.f32.mrb[0].mxu0
    %552 = vmatprep.mubr.bf16.mxu0 0
    %553 = vmatmul.mubr.bf16.gmra.mrb[0].mxu0 %v124
    %v554 = vpop.f32.mrb[0].mxu0
    %v555 = vadd.f32 0.0, %v554
    %v556 = vpop.f32.mrb[0].mxu0
    %v557 = vpop.f32.mrb[0].mxu0
    %v558 = vadd.f32 0.0, %v557
    %v559 = vpop.f32.mrb[0].mxu0
    %560 = vmatprep.mubr.bf16.mxu0 0
    %561 = vmatmul.mubr.bf16.gmra.mrb[0].mxu0 %v125
    %v562 = vpop.f32.mrb[0].mxu0
    %v563 = vadd.f32 0.0, %v562
    %v564 = vpop.f32.mrb[0].mxu0
    %v565 = vpop.f32.mrb[0].mxu0
    %v566 = vadd.f32 0.0, %v565
    %v567 = vpop.f32.mrb[0].mxu0
    %568 = vmatprep.mubr.bf16.mxu0 0
    %569 = vmatmul.mubr.bf16.gmra.mrb[0].mxu0 %v126
    %v570 = vpop.f32.mrb[0].mxu0
    %v571 = vadd.f32 0.0, %v570
    %v572 = vpop.f32.mrb[0].mxu0
    %v573 = vpop.f32.mrb[0].mxu0
    %v574 = vadd.f32 0.0, %v573
    %v575 = vpop.f32.mrb[0].mxu0
    %576 = vdwg.mxu0
    %v577 = vpack.c.bf16 %v518, %v515
    %v578 = vpack.c.bf16 %v526, %v523
    %v579 = vpack.c.bf16 %v534, %v531
    %v580 = vpack.c.bf16 %v542, %v539
    %v581 = vpack.c.bf16 %v550, %v547
    %v582 = vpack.c.bf16 %v558, %v555
    %v583 = vpack.c.bf16 %v566, %v563
    %v584 = vpack.c.bf16 %v574, %v571
    %v586 = vlaneseq
    %v587 = vshrl.u32 %v586, 7
    %v588 = vsub.s32 0, %v587
    %v589 = vrot.slane %v479, %v588
    %v607 = vunpack.c.l.b16 %v463
    %v608 = vunpack.c.l.b16 %v464
    %v609 = vunpack.c.l.b16 %v465
    %v610 = vunpack.c.l.b16 %v466
    %v611 = vunpack.c.l.b16 %v467
    %v612 = vunpack.c.l.b16 %v468
    %v613 = vunpack.c.l.b16 %v469
    %v614 = vunpack.c.l.b16 %v470
    %v615 = vunpack.c.l.b16 %v471
    %v616 = vunpack.c.l.b16 %v472
    %v617 = vunpack.c.l.b16 %v473
    %v618 = vunpack.c.l.b16 %v474
    %v619 = vunpack.c.l.b16 %v475
    %v620 = vunpack.c.l.b16 %v476
    %v621 = vunpack.c.l.b16 %v477
    %v622 = vunpack.c.l.b16 %v478
    %v623 = vpack.c.b16 %v608, %v607
    %v624 = vpack.c.b16 %v610, %v609
    %v625 = vpack.c.b16 %v612, %v611
    %v626 = vpack.c.b16 %v614, %v613
    %v627 = vpack.c.b16 %v616, %v615
    %v628 = vpack.c.b16 %v618, %v617
    %v629 = vpack.c.b16 %v620, %v619
    %v630 = vpack.c.b16 %v622, %v621
    %639 = vmatprep.subr.bf16.mxu0 0
    %640 = vmatpush1.bf16.msra.mxu0 %v623
    %641 = vmatprep.subr.bf16.mxu0 0
    %642 = vmatpush1.bf16.msra.mxu0 %v624
    %643 = vmatprep.subr.bf16.mxu0 0
    %644 = vmatpush1.bf16.msra.mxu0 %v625
    %645 = vmatprep.subr.bf16.mxu0 0
    %646 = vmatpush1.bf16.msra.mxu0 %v626
    %647 = vmatprep.subr.bf16.mxu0 0
    %648 = vmatpush1.bf16.msra.mxu0 %v627
    %649 = vmatprep.subr.bf16.mxu0 0
    %650 = vmatpush1.bf16.msra.mxu0 %v628
    %651 = vmatprep.subr.bf16.mxu0 0
    %652 = vmatpush1.bf16.msra.mxu0 %v629
    %653 = vmatprep.subr.bf16.mxu0 0
    %654 = vmatpush1.bf16.msra.mxu0 %v630
    %655 = vmatprep.subr.bf16.mxu0 0
    %656 = vmatpush1.bf16.msra.mxu0 0
    %657 = vmatprep.subr.bf16.mxu0 0
    %658 = vmatpush1.bf16.msra.mxu0 0
    %659 = vmatprep.subr.bf16.mxu0 0
    %660 = vmatpush1.bf16.msra.mxu0 0
    %661 = vmatprep.subr.bf16.mxu0 0
    %662 = vmatpush1.bf16.msra.mxu0 0
    %663 = vmatprep.subr.bf16.mxu0 0
    %664 = vmatpush1.bf16.msra.mxu0 0
    %665 = vmatprep.subr.bf16.mxu0 0
    %666 = vmatpush1.bf16.msra.mxu0 0
    %667 = vmatprep.subr.bf16.mxu0 0
    %668 = vmatpush1.bf16.msra.mxu0 0
    %669 = vmatprep.subr.bf16.mxu0 0
    %670 = vmatpush1.bf16.msra.mxu0 0
    %671 = vmatprep.mubr.bf16.mxu0 0
    %672 = vmatmul.mubr.bf16.gmra.mrb[0].mxu0 %v577
    %v673 = vpop.f32.mrb[0].mxu0
    %v674 = vadd.f32 %v589, %v673
    %v675 = vpop.f32.mrb[0].mxu0
    %v676 = vpop.f32.mrb[0].mxu0
    %v677 = vadd.f32 %v589, %v676
    %v678 = vpop.f32.mrb[0].mxu0
    %679 = vmatprep.mubr.bf16.mxu0 0
    %680 = vmatmul.mubr.bf16.gmra.mrb[0].mxu0 %v578
    %v681 = vpop.f32.mrb[0].mxu0
    %v682 = vadd.f32 %v589, %v681
    %v683 = vpop.f32.mrb[0].mxu0
    %v684 = vpop.f32.mrb[0].mxu0
    %v685 = vadd.f32 %v589, %v684
    %v686 = vpop.f32.mrb[0].mxu0
    %687 = vmatprep.mubr.bf16.mxu0 0
    %688 = vmatmul.mubr.bf16.gmra.mrb[0].mxu0 %v579
    %v689 = vpop.f32.mrb[0].mxu0
    %v690 = vadd.f32 %v589, %v689
    %v691 = vpop.f32.mrb[0].mxu0
    %v692 = vpop.f32.mrb[0].mxu0
    %v693 = vadd.f32 %v589, %v692
    %v694 = vpop.f32.mrb[0].mxu0
    %695 = vmatprep.mubr.bf16.mxu0 0
    %696 = vmatmul.mubr.bf16.gmra.mrb[0].mxu0 %v580
    %v697 = vpop.f32.mrb[0].mxu0
    %v698 = vadd.f32 %v589, %v697
    %v699 = vpop.f32.mrb[0].mxu0
    %v700 = vpop.f32.mrb[0].mxu0
    %v701 = vadd.f32 %v589, %v700
    %v702 = vpop.f32.mrb[0].mxu0
    %703 = vmatprep.mubr.bf16.mxu0 0
    %704 = vmatmul.mubr.bf16.gmra.mrb[0].mxu0 %v581
    %v705 = vpop.f32.mrb[0].mxu0
    %v706 = vadd.f32 %v589, %v705
    %v707 = vpop.f32.mrb[0].mxu0
    %v708 = vpop.f32.mrb[0].mxu0
    %v709 = vadd.f32 %v589, %v708
    %v710 = vpop.f32.mrb[0].mxu0
    %711 = vmatprep.mubr.bf16.mxu0 0
    %712 = vmatmul.mubr.bf16.gmra.mrb[0].mxu0 %v582
    %v713 = vpop.f32.mrb[0].mxu0
    %v714 = vadd.f32 %v589, %v713
    %v715 = vpop.f32.mrb[0].mxu0
    %v716 = vpop.f32.mrb[0].mxu0
    %v717 = vadd.f32 %v589, %v716
    %v718 = vpop.f32.mrb[0].mxu0
    %719 = vmatprep.mubr.bf16.mxu0 0
    %720 = vmatmul.mubr.bf16.gmra.mrb[0].mxu0 %v583
    %v721 = vpop.f32.mrb[0].mxu0
    %v722 = vadd.f32 %v589, %v721
    %v723 = vpop.f32.mrb[0].mxu0
    %v724 = vpop.f32.mrb[0].mxu0
    %v725 = vadd.f32 %v589, %v724
    %v726 = vpop.f32.mrb[0].mxu0
    %727 = vmatprep.mubr.bf16.mxu0 0
    %728 = vmatmul.mubr.bf16.gmra.mrb[0].mxu0 %v584
    %v729 = vpop.f32.mrb[0].mxu0
    %v730 = vadd.f32 %v589, %v729
    %v731 = vpop.f32.mrb[0].mxu0
    %v732 = vpop.f32.mrb[0].mxu0
    %v733 = vadd.f32 %v589, %v732
    %v734 = vpop.f32.mrb[0].mxu0
    %735 = vdwg.mxu0
    %736 = vst [vmem:[%s6] sm:$0xff] %v674
    %737 = vst [vmem:[%s6 + $0x8] sm:$0xff] %v677
    %738 = vst [vmem:[%s6 + $0x10] sm:$0xff] %v682
    %739 = vst [vmem:[%s6 + $0x18] sm:$0xff] %v685
    %740 = vst [vmem:[%s6 + $0x20] sm:$0xff] %v690
    %741 = vst [vmem:[%s6 + $0x28] sm:$0xff] %v693
    %742 = vst [vmem:[%s6 + $0x30] sm:$0xff] %v698
    %743 = vst [vmem:[%s6 + $0x38] sm:$0xff] %v701
    %744 = vst [vmem:[%s6 + $0x40] sm:$0xff] %v706
    %745 = vst [vmem:[%s6 + $0x48] sm:$0xff] %v709
    %746 = vst [vmem:[%s6 + $0x50] sm:$0xff] %v714
    %747 = vst [vmem:[%s6 + $0x58] sm:$0xff] %v717
    %748 = vst [vmem:[%s6 + $0x60] sm:$0xff] %v722
    %749 = vst [vmem:[%s6 + $0x68] sm:$0xff] %v725
    %750 = vst [vmem:[%s6 + $0x70] sm:$0xff] %v730
    %751 = vst [vmem:[%s6 + $0x78] sm:$0xff] %v733
    // Predicated region
    $region30: #{_gcn_apply.1} parent=1 // pred_check
      _
    $region31: #{_gcn_apply.1} parent=1 // pred_check_branch
      %753 = sbr.rel (0) target = $region33
    $region32: #{_gcn_apply.1} parent=1 // pred_region
      _
    $region33: #{_gcn_apply.1} parent=1 // pred_fallthru
      _
    // Predicated region
    $region34: #{_gcn_apply.1} parent=1 // pred_check
      _
    $region35: #{_gcn_apply.1} parent=1 // pred_check_branch
      %755 = sbr.rel (0) target = $region37
    $region36: #{_gcn_apply.1} parent=1 // pred_region
      _
    $region37: #{_gcn_apply.1} parent=1 // pred_fallthru
      _
    %756 = vsyncpa [#allocation3], 1

</llo_original>
